<compile_context>
chip_gen: v5e
topology: v5e:2x2
jax: 0.10.0
libtpu: 0.0.40
codegen_flags: <defaults>
</compile_context>

<pallas_src>
import functools

import jax
import jax.numpy as jnp
from jax import lax
from jax.experimental import pallas as pl
from jax.experimental.pallas import tpu as pltpu


def _round_up(n, m):
    return ((n + m - 1) // m) * m


def _decoder_single_kernel(x_ref, w_ref, y_ref, cov_in_ref, cov_out_ref,
                           cov_in_acc, cov_out_acc, *, total_b, mxu_dtype):
    i = pl.program_id(0)

    @pl.when(i == 0)
    def _init():
        cov_in_acc[...] = jnp.zeros_like(cov_in_acc)
        cov_out_acc[...] = jnp.zeros_like(cov_out_acc)

    x = x_ref[...]          # (tB, Zp) f32, padded rows/cols are zero
    w = w_ref[...]          # (Xp, Zp) f32, padded rows/cols are zero

    # cov_in partial sum: x^T x  (contract the batch dim; no explicit transpose).
    # Kept in f32 so the input covariance matches the f32 PyTorch reference exactly.
    cov_in_acc[...] += lax.dot_general(
        x, x,
        dimension_numbers=(((0,), (0,)), ((), ())),
        preferred_element_type=jnp.float32,
    )

    # y = tanh(x @ W^T): contract dim 1 with dim 1, bf16 MXU operands, f32 accumulation.
    xm = x.astype(mxu_dtype)
    wm = w.astype(mxu_dtype)
    y = jnp.tanh(
        lax.dot_general(
            xm, wm,
            dimension_numbers=(((1,), (1,)), ((), ())),
            preferred_element_type=jnp.float32,
        )
    )
    y_ref[...] = y.astype(y_ref.dtype)

    # cov_out partial sum: y^T y (contract batch dim), bf16 operands / f32 accumulation.
    ym = y.astype(mxu_dtype)
    cov_out_acc[...] += lax.dot_general(
        ym, ym,
        dimension_numbers=(((0,), (0,)), ((), ())),
        preferred_element_type=jnp.float32,
    )

    @pl.when(i == pl.num_programs(0) - 1)
    def _finalize():
        inv_b = jnp.float32(1.0 / total_b)   # normalize by the TOTAL (unpadded) batch size
        cov_in_ref[...] = (cov_in_acc[...] * inv_b).astype(cov_in_ref.dtype)
        cov_out_ref[...] = (cov_out_acc[...] * inv_b).astype(cov_out_ref.dtype)


def base_decoder_single_forward(x, w, *, tile_b=512, mxu_dtype=jnp.bfloat16):
    """x: (B, z_dim) float32, w: (x_dim, z_dim) float32 (nn.Linear.weight layout).
    Returns (y, cov_in, cov_out)."""
    B, z_dim = x.shape
    x_dim, z_dim_w = w.shape
    assert z_dim_w == z_dim

    # Lane-dense padding (last dim -> multiple of 128) and sublane-friendly batch tile.
    Zp = _round_up(z_dim, 128)
    Xp = _round_up(x_dim, 128)
    tB = min(_round_up(tile_b, 8), _round_up(B, 8))
    Bp = _round_up(B, tB)

    x_p = jnp.zeros((Bp, Zp), jnp.float32).at[:B, :z_dim].set(x.astype(jnp.float32))
    w_p = jnp.zeros((Xp, Zp), jnp.float32).at[:x_dim, :z_dim].set(w.astype(jnp.float32))

    grid = (Bp // tB,)

    out_shapes = (
        jax.ShapeDtypeStruct((Bp, Xp), jnp.float32),   # y (padded)
        jax.ShapeDtypeStruct((Zp, Zp), jnp.float32),   # cov_in (padded)
        jax.ShapeDtypeStruct((Xp, Xp), jnp.float32),   # cov_out (padded)
    )

    # VMEM budget (double-buffered tiles + resident outputs + accumulators), with headroom.
    vmem_bytes = 4 * (
        2 * tB * Zp                 # x tiles (double-buffered)
        + 2 * tB * Xp               # y tiles (double-buffered)
        + 2 * Xp * Zp               # W
        + 2 * (Zp * Zp + Xp * Xp)   # cov outputs
        + (Zp * Zp + Xp * Xp)       # scratch accumulators
    )
    vmem_limit = int(min(max(2 * vmem_bytes, 16 * 2**20), 48 * 2**20))

    kernel = functools.partial(
        _decoder_single_kernel, total_b=B, mxu_dtype=mxu_dtype)

    y_p, cov_in_p, cov_out_p = pl.pallas_call(
        kernel,
        out_shape=out_shapes,
        grid_spec=pltpu.PrefetchScalarGridSpec(
            num_scalar_prefetch=0,
            grid=grid,
            in_specs=[
                pl.BlockSpec((tB, Zp), lambda i: (i, 0)),   # x tile marches over batch
                pl.BlockSpec((Xp, Zp), lambda i: (0, 0)),   # W resident
            ],
            out_specs=(
                pl.BlockSpec((tB, Xp), lambda i: (i, 0)),   # y tile per grid step
                pl.BlockSpec((Zp, Zp), lambda i: (0, 0)),   # cov_in resident (reduction)
                pl.BlockSpec((Xp, Xp), lambda i: (0, 0)),   # cov_out resident (reduction)
            ),
            scratch_shapes=[
                pltpu.VMEM((Zp, Zp), jnp.float32),          # cov_in accumulator
                pltpu.VMEM((Xp, Xp), jnp.float32),          # cov_out accumulator
            ],
        ),
        compiler_params=pltpu.CompilerParams(
            dimension_semantics=("arbitrary",),             # batch axis is a reduction
            vmem_limit_bytes=vmem_limit,
        ),
    )(x_p, w_p)

    # Strip padding.
    return (
        y_p[:B, :x_dim],
        cov_in_p[:z_dim, :z_dim],
        cov_out_p[:x_dim, :x_dim],
    )


def xavier_normal(key, fan_out, fan_in):
    # torch.nn.init.xavier_normal_: std = sqrt(2 / (fan_in + fan_out))
    std = (2.0 / (fan_in + fan_out)) ** 0.5
    return std * jax.random.normal(key, (fan_out, fan_in), dtype=jnp.float32)


if __name__ == "__main__":
    key = jax.random.PRNGKey(0)
    k_x, k_w = jax.random.split(key)

    B, z_dim, x_dim = 8, 32, 16  # small shapes consistent with the module
    x = jax.random.normal(k_x, (B, z_dim), dtype=jnp.float32)
    w = xavier_normal(k_w, x_dim, z_dim)  # nn.Linear(z_dim, x_dim).weight

    y, cov_in, cov_out = base_decoder_single_forward(x, w)
    jax.block_until_ready((y, cov_in, cov_out))

    # --- references ---
    # Matching-precision reference (bf16 MXU operands, f32 accumulation), as in the kernel.
    xb = x.astype(jnp.bfloat16)
    wb = w.astype(jnp.bfloat16)
    y_ref = jnp.tanh(jnp.dot(xb, wb.T, preferred_element_type=jnp.float32))
    cov_in_ref = jnp.dot(x.T, x, preferred_element_type=jnp.float32) / B   # exact f32 path
    yb = y.astype(jnp.bfloat16)  # kernel uses its own f32 y, cast to bf16, for cov_out
    cov_out_ref = jnp.dot(yb.T, yb, preferred_element_type=jnp.float32) / B

    assert jnp.allclose(y, y_ref, atol=1e-4), "y mismatch vs bf16-MXU reference"
    assert jnp.allclose(cov_in, cov_in_ref, atol=1e-5), "cov_in mismatch vs f32 reference"
    assert jnp.allclose(cov_out, cov_out_ref, atol=1e-4), "cov_out mismatch vs reference"

    # Loose sanity check against the pure-f32 PyTorch semantics.
    y_f32 = jnp.tanh(x @ w.T)
    assert jnp.allclose(y, y_f32, atol=3e-2), "y too far from f32 reference"
    assert jnp.allclose(cov_out, (y_f32.T @ y_f32) / B, atol=3e-2), "cov_out too far from f32 reference"

    print("KERNEL_OK")
</pallas_src>

<mosaic_0001>
module attributes {stable_mosaic.version = 11 : i64} {
  func.func @_decoder_single_kernel(%arg0: i32, %arg1: memref<8x128xf32, #tpu.memory_space<vmem>>, %arg2: memref<128x128xf32, #tpu.memory_space<vmem>>, %arg3: memref<8x128xf32, #tpu.memory_space<vmem>>, %arg4: memref<128x128xf32, #tpu.memory_space<vmem>>, %arg5: memref<128x128xf32, #tpu.memory_space<vmem>>, %arg6: memref<128x128xf32, #tpu.memory_space<vmem>>, %arg7: memref<128x128xf32, #tpu.memory_space<vmem>>) attributes {dimension_semantics = [#tpu.dimension_semantics<arbitrary>], iteration_bounds = array<i64: 1>, scalar_prefetch = 0 : i64, scratch_operands = 2 : i64, tpu.core_type = #tpu.core_type<tc>, window_params = [{transform_indices = @transform_0, window_bounds = array<i64: 8, 128>}, {pipeline_mode = #tpu.pipeline_mode<synchronous>, transform_indices = @transform_1, window_bounds = array<i64: 128, 128>}, {transform_indices = @transform_2, window_bounds = array<i64: 8, 128>}, {pipeline_mode = #tpu.pipeline_mode<synchronous>, transform_indices = @transform_3, window_bounds = array<i64: 128, 128>}, {pipeline_mode = #tpu.pipeline_mode<synchronous>, transform_indices = @transform_4, window_bounds = array<i64: 128, 128>}]} {
    %c0_i32 = arith.constant 0 : i32
    %0 = arith.cmpi eq, %arg0, %c0_i32 : i32
    %1 = arith.extui %0 : i1 to i32
    %c0_i32_0 = arith.constant 0 : i32
    %2 = arith.cmpi ne, %1, %c0_i32_0 : i32
    scf.if %2 {
      %cst_18 = arith.constant 0.000000e+00 : f32
      %22 = vector.broadcast %cst_18 : f32 to vector<128x128xf32>
      %c0_19 = arith.constant 0 : index
      %c0_20 = arith.constant 0 : index
      %23 = vector.load %arg6[%c0_19, %c0_20] : memref<128x128xf32, #tpu.memory_space<vmem>>, vector<128x128xf32>
      tpu.vector_store %arg6[%c0_19, %c0_20], %22 {strides = array<i32>} : memref<128x128xf32, #tpu.memory_space<vmem>>, vector<128x128xf32>,
      %cst_21 = arith.constant 0.000000e+00 : f32
      %24 = vector.broadcast %cst_21 : f32 to vector<128x128xf32>
      %c0_22 = arith.constant 0 : index
      %c0_23 = arith.constant 0 : index
      %25 = vector.load %arg7[%c0_22, %c0_23] : memref<128x128xf32, #tpu.memory_space<vmem>>, vector<128x128xf32>
      tpu.vector_store %arg7[%c0_22, %c0_23], %24 {strides = array<i32>} : memref<128x128xf32, #tpu.memory_space<vmem>>, vector<128x128xf32>,
    } else {
    }
    %c0 = arith.constant 0 : index
    %c0_1 = arith.constant 0 : index
    %3 = vector.load %arg1[%c0, %c0_1] : memref<8x128xf32, #tpu.memory_space<vmem>>, vector<8x128xf32>
    %c0_2 = arith.constant 0 : index
    %c0_3 = arith.constant 0 : index
    %4 = vector.load %arg2[%c0_2, %c0_3] : memref<128x128xf32, #tpu.memory_space<vmem>>, vector<128x128xf32>
    %c0_4 = arith.constant 0 : index
    %c0_5 = arith.constant 0 : index
    %5 = vector.load %arg6[%c0_4, %c0_5] : memref<128x128xf32, #tpu.memory_space<vmem>>, vector<128x128xf32>
    %cst = arith.constant dense<0.000000e+00> : vector<128x128xf32>
    %6 = tpu.matmul %3, %3, %cst {dimension_numbers = #tpu.dot_dimension_numbers<[0], [0], [1], [1], [0, 1, 1, 1], [], []>} : vector<8x128xf32>, vector<8x128xf32>, vector<128x128xf32> -> vector<128x128xf32>
    %7 = arith.addf %5, %6 : vector<128x128xf32>
    %c0_6 = arith.constant 0 : index
    %c0_7 = arith.constant 0 : index
    %8 = vector.load %arg6[%c0_6, %c0_7] : memref<128x128xf32, #tpu.memory_space<vmem>>, vector<128x128xf32>
    tpu.vector_store %arg6[%c0_6, %c0_7], %7 {strides = array<i32>} : memref<128x128xf32, #tpu.memory_space<vmem>>, vector<128x128xf32>,
    %9 = arith.truncf %3 : vector<8x128xf32> to vector<8x128xbf16>
    %10 = arith.truncf %4 : vector<128x128xf32> to vector<128x128xbf16>
    %cst_8 = arith.constant dense<0.000000e+00> : vector<8x128xf32>
    %11 = tpu.matmul %9, %10, %cst_8 {dimension_numbers = #tpu.dot_dimension_numbers<[1], [1], [0], [0], [0, 0, 1, 0], [], []>} : vector<8x128xbf16>, vector<128x128xbf16>, vector<8x128xf32> -> vector<8x128xf32>
    %12 = math.tanh %11 : vector<8x128xf32>
    %c0_9 = arith.constant 0 : index
    %c0_10 = arith.constant 0 : index
    %13 = vector.load %arg3[%c0_9, %c0_10] : memref<8x128xf32, #tpu.memory_space<vmem>>, vector<8x128xf32>
    tpu.vector_store %arg3[%c0_9, %c0_10], %12 {strides = array<i32>} : memref<8x128xf32, #tpu.memory_space<vmem>>, vector<8x128xf32>,
    %14 = arith.truncf %12 : vector<8x128xf32> to vector<8x128xbf16>
    %c0_11 = arith.constant 0 : index
    %c0_12 = arith.constant 0 : index
    %15 = vector.load %arg7[%c0_11, %c0_12] : memref<128x128xf32, #tpu.memory_space<vmem>>, vector<128x128xf32>
    %cst_13 = arith.constant dense<0.000000e+00> : vector<128x128xf32>
    %16 = tpu.matmul %14, %14, %cst_13 {dimension_numbers = #tpu.dot_dimension_numbers<[0], [0], [1], [1], [0, 1, 1, 1], [], []>} : vector<8x128xbf16>, vector<8x128xbf16>, vector<128x128xf32> -> vector<128x128xf32>
    %17 = arith.addf %15, %16 : vector<128x128xf32>
    %c0_14 = arith.constant 0 : index
    %c0_15 = arith.constant 0 : index
    %18 = vector.load %arg7[%c0_14, %c0_15] : memref<128x128xf32, #tpu.memory_space<vmem>>, vector<128x128xf32>
    tpu.vector_store %arg7[%c0_14, %c0_15], %17 {strides = array<i32>} : memref<128x128xf32, #tpu.memory_space<vmem>>, vector<128x128xf32>,
    %c0_i32_16 = arith.constant 0 : i32
    %19 = arith.cmpi eq, %arg0, %c0_i32_16 : i32
    %20 = arith.extui %19 : i1 to i32
    %c0_i32_17 = arith.constant 0 : i32
    %21 = arith.cmpi ne, %20, %c0_i32_17 : i32
    scf.if %21 {
      %c0_18 = arith.constant 0 : index
      %c0_19 = arith.constant 0 : index
      %22 = vector.load %arg6[%c0_18, %c0_19] : memref<128x128xf32, #tpu.memory_space<vmem>>, vector<128x128xf32>
      %cst_20 = arith.constant 1.250000e-01 : f32
      %23 = vector.broadcast %cst_20 : f32 to vector<128x128xf32>
      %24 = arith.mulf %22, %23 : vector<128x128xf32>
      %c0_21 = arith.constant 0 : index
      %c0_22 = arith.constant 0 : index
      %25 = vector.load %arg4[%c0_21, %c0_22] : memref<128x128xf32, #tpu.memory_space<vmem>>, vector<128x128xf32>
      tpu.vector_store %arg4[%c0_21, %c0_22], %24 {strides = array<i32>} : memref<128x128xf32, #tpu.memory_space<vmem>>, vector<128x128xf32>,
      %c0_23 = arith.constant 0 : index
      %c0_24 = arith.constant 0 : index
      %26 = vector.load %arg7[%c0_23, %c0_24] : memref<128x128xf32, #tpu.memory_space<vmem>>, vector<128x128xf32>
      %cst_25 = arith.constant 1.250000e-01 : f32
      %27 = vector.broadcast %cst_25 : f32 to vector<128x128xf32>
      %28 = arith.mulf %26, %27 : vector<128x128xf32>
      %c0_26 = arith.constant 0 : index
      %c0_27 = arith.constant 0 : index
      %29 = vector.load %arg5[%c0_26, %c0_27] : memref<128x128xf32, #tpu.memory_space<vmem>>, vector<128x128xf32>
      tpu.vector_store %arg5[%c0_26, %c0_27], %28 {strides = array<i32>} : memref<128x128xf32, #tpu.memory_space<vmem>>, vector<128x128xf32>,
    } else {
    }
    return
  }
  func.func @transform_0(%arg0: i32) -> (i32, i32) {
    %c0_i32 = arith.constant 0 : i32
    %c0_i32_0 = arith.constant 0 : i32
    return %arg0, %c0_i32 : i32, i32
  }
  func.func @transform_1(%arg0: i32) -> (i32, i32) {
    %c0_i32 = arith.constant 0 : i32
    %c0_i32_0 = arith.constant 0 : i32
    %c0_i32_1 = arith.constant 0 : i32
    return %c0_i32, %c0_i32_0 : i32, i32
  }
  func.func @transform_2(%arg0: i32) -> (i32, i32) {
    %c0_i32 = arith.constant 0 : i32
    %c0_i32_0 = arith.constant 0 : i32
    return %arg0, %c0_i32 : i32, i32
  }
  func.func @transform_3(%arg0: i32) -> (i32, i32) {
    %c0_i32 = arith.constant 0 : i32
    %c0_i32_0 = arith.constant 0 : i32
    %c0_i32_1 = arith.constant 0 : i32
    return %c0_i32, %c0_i32_0 : i32, i32
  }
  func.func @transform_4(%arg0: i32) -> (i32, i32) {
    %c0_i32 = arith.constant 0 : i32
    %c0_i32_0 = arith.constant 0 : i32
    %c0_i32_1 = arith.constant 0 : i32
    return %c0_i32, %c0_i32_0 : i32, i32
  }
}

</mosaic_0001>

<llo_original>
// kernel: tpu_custom_call.1
$region0: #{tpu_custom_call.1}
  #allocation0 [shape = 'u32[]', space=smem, size = 0x4, offset = 0x4, fixed_abs, tag = 'smem constant byte address 0x4 - core index']
  #allocation1 [shape = 'u32[72,128]{1,0:T(1,128)}', space=vmem, size = 0x9000, scoped, tag = 'internal scratch']
  #allocation2 [shape = 'f32[128,128]{1,0:T(8,128)}', space=vmem, size = 0x10000, scoped, tag = 'scratch operand']
  #allocation3 [shape = 'f32[128,128]{1,0:T(8,128)}', space=vmem, size = 0x10000, scoped, tag = 'scratch operand']
  %s0 = inlined_call_operand.hbm [shape: f32[8,128], index: 0, kind: input, shape index: {}]
  %s1 = inlined_call_operand.hbm [shape: f32[128,128], index: 1, kind: input, shape index: {}]
  %s2 = inlined_call_operand.hbm [shape: f32[8,128], index: 2, kind: output, shape index: {0}]
  %s3 = inlined_call_operand.hbm [shape: f32[128,128], index: 3, kind: output, shape index: {1}]
  %s4 = inlined_call_operand.hbm [shape: f32[128,128], index: 4, kind: output, shape index: {2}]
  %5 = xla_tuple %s2, %s3, %s4
  %s6 = sld [smem:[#allocation0]]
  $region50: #{tpu_custom_call.1} parent=0
    _
  %s8 = ssub.s32 1, %s6
  %s9 = scalar_select 0, %s8, %s6
  $region1: #{tpu_custom_call.1} parent=0
    #allocation4 [shape = 'u8[4096]{0}', space=vmem, size = 0x1000, scoped, tag = 'input window, operand 0, single buffered']
    #allocation5 [shape = 's32[1]{0}', space=sflag, size = 0x4, scoped, tag = 'scoped memory for tpu_custom_call.1']
    #allocation6 [shape = 's32[1]{0}', space=sflag, size = 0x4, scoped, tag = 'scoped memory for tpu_custom_call.1']
    #allocation7 [shape = 'u8[65536]{0}', space=vmem, size = 0x10000, scoped, tag = 'input window, operand 1, single buffered']
    #allocation8 [shape = 's32[1]{0}', space=sflag, size = 0x4, scoped, tag = 'scoped memory for tpu_custom_call.1']
    #allocation9 [shape = 'u8[4096]{0}', space=vmem, size = 0x1000, scoped, tag = 'output window, operand 0, single buffered']
    #allocation10 [shape = 'u8[65536]{0}', space=vmem, size = 0x10000, scoped, tag = 'output window, operand 1, single buffered']
    #allocation11 [shape = 's32[1]{0}', space=sflag, size = 0x4, scoped, tag = 'scoped memory for tpu_custom_call.1']
    #allocation12 [shape = 'u8[65536]{0}', space=vmem, size = 0x10000, scoped, tag = 'output window, operand 2, single buffered']
    %10 = vsyncpa [#allocation5], 0
    %11 = vsyncpa [#allocation8], 0
    %12 = vsyncpa [#allocation6], 0
    %13 = vsyncpa [#allocation11], 0
    // Predicated region
    $region2: #{tpu_custom_call.1} parent=1 // pred_check
      _
    $region3: #{tpu_custom_call.1} parent=1 // pred_check_branch
      %15 = sbr.rel (0) target = $region5
    $region4: #{tpu_custom_call.1} parent=1 // pred_region
      %17 = vsyncadd [#allocation5], 0
      %s19 = sshll.u32 %s0, 4
      %s20 = int_to_ptr.hbm [resolvable:$true] %s19
      %s21 = sshll.u32 [#allocation4], 4
      %s22 = int_to_ptr.vmem [resolvable:$true] %s21
      %24 = dma.hbm_to_vmem [thread:$0]  %s20, 128, %s22, [#allocation5]
    $region5: #{tpu_custom_call.1} parent=1 // pred_fallthru
      _
    // Predicated region
    $region6: #{tpu_custom_call.1} parent=1 // pred_check
      _
    $region7: #{tpu_custom_call.1} parent=1 // pred_check_branch
      %26 = sbr.rel (0) target = $region9
    $region8: #{tpu_custom_call.1} parent=1 // pred_region
      %28 = vsyncadd [#allocation8], 0
      %s29 = sshll.u32 %s1, 4
      %s30 = int_to_ptr.hbm [resolvable:$true] %s29
      %s31 = sshll.u32 [#allocation7], 4
      %s32 = int_to_ptr.vmem [resolvable:$true] %s31
      %37 = dma.hbm_to_vmem [thread:$0]  %s30, 2048, %s32, [#allocation8], 128, 128, 8
    $region9: #{tpu_custom_call.1} parent=1 // pred_fallthru
      _
    // Predicated region
    $region10: #{tpu_custom_call.1} parent=1 // pred_check
      _
    $region11: #{tpu_custom_call.1} parent=1 // pred_check_branch
      %39 = sbr.rel (0) target = $region13
    $region12: #{tpu_custom_call.1} parent=1 // pred_region
      %41 = dma.done [#allocation5], 128
    $region13: #{tpu_custom_call.1} parent=1 // pred_fallthru
      _
    // Predicated region
    $region14: #{tpu_custom_call.1} parent=1 // pred_check
      _
    $region15: #{tpu_custom_call.1} parent=1 // pred_check_branch
      %43 = sbr.rel (0) target = $region17
    $region16: #{tpu_custom_call.1} parent=1 // pred_region
      %45 = dma.done [#allocation8], 2048
    $region17: #{tpu_custom_call.1} parent=1 // pred_fallthru
      _
    %p47 = scmp.eq.s32.totalorder 0, 0
    // Predicated region
    $region18: #{tpu_custom_call.1} parent=1 // pred_check
      %p48 = pneg %p47
    $region19: #{tpu_custom_call.1} parent=1 // pred_check_branch
      %50 = sbr.rel (%p48) target = $region21
    $region20: #{tpu_custom_call.1} parent=1 // pred_region
      %51 = vst [vmem:[#allocation2] sm:$0xff] 0.0
      %52 = vst [vmem:[#allocation2 + $0x8] sm:$0xff] 0.0
      %53 = vst [vmem:[#allocation2 + $0x10] sm:$0xff] 0.0
      %54 = vst [vmem:[#allocation2 + $0x18] sm:$0xff] 0.0
      %55 = vst [vmem:[#allocation2 + $0x20] sm:$0xff] 0.0
      %56 = vst [vmem:[#allocation2 + $0x28] sm:$0xff] 0.0
      %57 = vst [vmem:[#allocation2 + $0x30] sm:$0xff] 0.0
      %58 = vst [vmem:[#allocation2 + $0x38] sm:$0xff] 0.0
      %59 = vst [vmem:[#allocation2 + $0x40] sm:$0xff] 0.0
      %60 = vst [vmem:[#allocation2 + $0x48] sm:$0xff] 0.0
      %61 = vst [vmem:[#allocation2 + $0x50] sm:$0xff] 0.0
      %62 = vst [vmem:[#allocation2 + $0x58] sm:$0xff] 0.0
      %63 = vst [vmem:[#allocation2 + $0x60] sm:$0xff] 0.0
      %64 = vst [vmem:[#allocation2 + $0x68] sm:$0xff] 0.0
      %65 = vst [vmem:[#allocation2 + $0x70] sm:$0xff] 0.0
      %66 = vst [vmem:[#allocation2 + $0x78] sm:$0xff] 0.0
      %67 = vst [vmem:[#allocation3] sm:$0xff] 0.0
      %68 = vst [vmem:[#allocation3 + $0x8] sm:$0xff] 0.0
      %69 = vst [vmem:[#allocation3 + $0x10] sm:$0xff] 0.0
      %70 = vst [vmem:[#allocation3 + $0x18] sm:$0xff] 0.0
      %71 = vst [vmem:[#allocation3 + $0x20] sm:$0xff] 0.0
      %72 = vst [vmem:[#allocation3 + $0x28] sm:$0xff] 0.0
      %73 = vst [vmem:[#allocation3 + $0x30] sm:$0xff] 0.0
      %74 = vst [vmem:[#allocation3 + $0x38] sm:$0xff] 0.0
      %75 = vst [vmem:[#allocation3 + $0x40] sm:$0xff] 0.0
      %76 = vst [vmem:[#allocation3 + $0x48] sm:$0xff] 0.0
      %77 = vst [vmem:[#allocation3 + $0x50] sm:$0xff] 0.0
      %78 = vst [vmem:[#allocation3 + $0x58] sm:$0xff] 0.0
      %79 = vst [vmem:[#allocation3 + $0x60] sm:$0xff] 0.0
      %80 = vst [vmem:[#allocation3 + $0x68] sm:$0xff] 0.0
      %81 = vst [vmem:[#allocation3 + $0x70] sm:$0xff] 0.0
      %82 = vst [vmem:[#allocation3 + $0x78] sm:$0xff] 0.0
    $region21: #{tpu_custom_call.1} parent=1 // pred_fallthru
      _
    %v83 = vld [vmem:[#allocation4] sm:$0xff]
    %v84 = vld [vmem:[#allocation7] sm:$0xff]
    %v85 = vld [vmem:[#allocation7 + $0x8] sm:$0xff]
    %v86 = vld [vmem:[#allocation7 + $0x10] sm:$0xff]
    %v87 = vld [vmem:[#allocation7 + $0x18] sm:$0xff]
    %v88 = vld [vmem:[#allocation7 + $0x20] sm:$0xff]
    %v89 = vld [vmem:[#allocation7 + $0x28] sm:$0xff]
    %v90 = vld [vmem:[#allocation7 + $0x30] sm:$0xff]
    %v91 = vld [vmem:[#allocation7 + $0x38] sm:$0xff]
    %v92 = vld [vmem:[#allocation7 + $0x40] sm:$0xff]
    %v93 = vld [vmem:[#allocation7 + $0x48] sm:$0xff]
    %v94 = vld [vmem:[#allocation7 + $0x50] sm:$0xff]
    %v95 = vld [vmem:[#allocation7 + $0x58] sm:$0xff]
    %v96 = vld [vmem:[#allocation7 + $0x60] sm:$0xff]
    %v97 = vld [vmem:[#allocation7 + $0x68] sm:$0xff]
    %v98 = vld [vmem:[#allocation7 + $0x70] sm:$0xff]
    %v99 = vld [vmem:[#allocation7 + $0x78] sm:$0xff]
    %v100 = vld [vmem:[#allocation2] sm:$0xff]
    %v101 = vld [vmem:[#allocation2 + $0x8] sm:$0xff]
    %v102 = vld [vmem:[#allocation2 + $0x10] sm:$0xff]
    %v103 = vld [vmem:[#allocation2 + $0x18] sm:$0xff]
    %v104 = vld [vmem:[#allocation2 + $0x20] sm:$0xff]
    %v105 = vld [vmem:[#allocation2 + $0x28] sm:$0xff]
    %v106 = vld [vmem:[#allocation2 + $0x30] sm:$0xff]
    %v107 = vld [vmem:[#allocation2 + $0x38] sm:$0xff]
    %v108 = vld [vmem:[#allocation2 + $0x40] sm:$0xff]
    %v109 = vld [vmem:[#allocation2 + $0x48] sm:$0xff]
    %v110 = vld [vmem:[#allocation2 + $0x50] sm:$0xff]
    %v111 = vld [vmem:[#allocation2 + $0x58] sm:$0xff]
    %v112 = vld [vmem:[#allocation2 + $0x60] sm:$0xff]
    %v113 = vld [vmem:[#allocation2 + $0x68] sm:$0xff]
    %v114 = vld [vmem:[#allocation2 + $0x70] sm:$0xff]
    %v115 = vld [vmem:[#allocation2 + $0x78] sm:$0xff]
    %116 = vxpose.xlu0.b32.start [1/16] %v83, 128
    %117 = vxpose.xlu0.b32.cont [2/16] 0.0, 128
    %118 = vxpose.xlu0.b32.cont [3/16] 0.0, 128
    %119 = vxpose.xlu0.b32.cont [4/16] 0.0, 128
    %120 = vxpose.xlu0.b32.cont [5/16] 0.0, 128
    %121 = vxpose.xlu0.b32.cont [6/16] 0.0, 128
    %122 = vxpose.xlu0.b32.cont [7/16] 0.0, 128
    %123 = vxpose.xlu0.b32.cont [8/16] 0.0, 128
    %124 = vxpose.xlu0.b32.cont [9/16] 0.0, 128
    %125 = vxpose.xlu0.b32.cont [10/16] 0.0, 128
    %126 = vxpose.xlu0.b32.cont [11/16] 0.0, 128
    %127 = vxpose.xlu0.b32.cont [12/16] 0.0, 128
    %128 = vxpose.xlu0.b32.cont [13/16] 0.0, 128
    %129 = vxpose.xlu0.b32.cont [14/16] 0.0, 128
    %130 = vxpose.xlu0.b32.cont [15/16] 0.0, 128
    %131 = vxpose.xlu0.b32.end [16/16] 0.0, 128
    %v132 = vpop.trf.xlu0
    %v133 = vpop.trf.xlu0
    %v134 = vpop.trf.xlu0
    %v135 = vpop.trf.xlu0
    %v136 = vpop.trf.xlu0
    %v137 = vpop.trf.xlu0
    %v138 = vpop.trf.xlu0
    %v139 = vpop.trf.xlu0
    %v140 = vpop.trf.xlu0
    %v141 = vpop.trf.xlu0
    %v142 = vpop.trf.xlu0
    %v143 = vpop.trf.xlu0
    %v144 = vpop.trf.xlu0
    %v145 = vpop.trf.xlu0
    %v146 = vpop.trf.xlu0
    %v147 = vpop.trf.xlu0
    %vm148 = vcmask 64512
    %v150 = vsel %vm148, %v132, 0
    %v153 = vsel %vm148, %v133, 0
    %v156 = vsel %vm148, %v134, 0
    %v159 = vsel %vm148, %v135, 0
    %v162 = vsel %vm148, %v136, 0
    %v165 = vsel %vm148, %v137, 0
    %v168 = vsel %vm148, %v138, 0
    %v171 = vsel %vm148, %v139, 0
    %v174 = vsel %vm148, %v140, 0
    %v177 = vsel %vm148, %v141, 0
    %v180 = vsel %vm148, %v142, 0
    %v183 = vsel %vm148, %v143, 0
    %v186 = vsel %vm148, %v144, 0
    %v189 = vsel %vm148, %v145, 0
    %v192 = vsel %vm148, %v146, 0
    %v195 = vsel %vm148, %v147, 0
    %197 = vmatpush.msra.mxu0 0.0
    %198 = vmatpush.msra.mxu0 0.0
    %199 = vmatpush.msra.mxu0 0.0
    %200 = vmatpush.msra.mxu0 0.0
    %201 = vmatpush.msra.mxu0 0.0
    %202 = vmatpush.msra.mxu0 0.0
    %203 = vmatpush.msra.mxu0 0.0
    %204 = vmatpush.msra.mxu0 0.0
    %205 = vmatpush.msra.mxu0 0.0
    %206 = vmatpush.msra.mxu0 0.0
    %207 = vmatpush.msra.mxu0 0.0
    %208 = vmatpush.msra.mxu0 0.0
    %209 = vmatpush.msra.mxu0 0.0
    %210 = vmatpush.msra.mxu0 0.0
    %211 = vmatpush.msra.mxu0 0.0
    %212 = vmatpush.msra.mxu0 %v83
    %213 = vmatmul.f32.gmra.mxu0 %v150
    %v214 = vpop.f32.mrf.mxu0
    %v215 = vadd.f32 0.0, %v214
    %216 = vmatmul.f32.gmra.mxu0 %v153
    %v217 = vpop.f32.mrf.mxu0
    %v218 = vadd.f32 0.0, %v217
    %219 = vmatmul.f32.gmra.mxu0 %v156
    %v220 = vpop.f32.mrf.mxu0
    %v221 = vadd.f32 0.0, %v220
    %222 = vmatmul.f32.gmra.mxu0 %v159
    %v223 = vpop.f32.mrf.mxu0
    %v224 = vadd.f32 0.0, %v223
    %225 = vmatmul.f32.gmra.mxu0 %v162
    %v226 = vpop.f32.mrf.mxu0
    %v227 = vadd.f32 0.0, %v226
    %228 = vmatmul.f32.gmra.mxu0 %v165
    %v229 = vpop.f32.mrf.mxu0
    %v230 = vadd.f32 0.0, %v229
    %231 = vmatmul.f32.gmra.mxu0 %v168
    %v232 = vpop.f32.mrf.mxu0
    %v233 = vadd.f32 0.0, %v232
    %234 = vmatmul.f32.gmra.mxu0 %v171
    %v235 = vpop.f32.mrf.mxu0
    %v236 = vadd.f32 0.0, %v235
    %237 = vmatmul.f32.gmra.mxu0 %v174
    %v238 = vpop.f32.mrf.mxu0
    %v239 = vadd.f32 0.0, %v238
    %240 = vmatmul.f32.gmra.mxu0 %v177
    %v241 = vpop.f32.mrf.mxu0
    %v242 = vadd.f32 0.0, %v241
    %243 = vmatmul.f32.gmra.mxu0 %v180
    %v244 = vpop.f32.mrf.mxu0
    %v245 = vadd.f32 0.0, %v244
    %246 = vmatmul.f32.gmra.mxu0 %v183
    %v247 = vpop.f32.mrf.mxu0
    %v248 = vadd.f32 0.0, %v247
    %249 = vmatmul.f32.gmra.mxu0 %v186
    %v250 = vpop.f32.mrf.mxu0
    %v251 = vadd.f32 0.0, %v250
    %252 = vmatmul.f32.gmra.mxu0 %v189
    %v253 = vpop.f32.mrf.mxu0
    %v254 = vadd.f32 0.0, %v253
    %255 = vmatmul.f32.gmra.mxu0 %v192
    %v256 = vpop.f32.mrf.mxu0
    %v257 = vadd.f32 0.0, %v256
    %258 = vmatmul.f32.gmra.mxu0 %v195
    %v259 = vpop.f32.mrf.mxu0
    %v260 = vadd.f32 0.0, %v259
    %261 = vdwg.mxu0
    %v262 = vadd.f32 %v100, %v215
    %v263 = vadd.f32 %v101, %v218
    %v264 = vadd.f32 %v102, %v221
    %v265 = vadd.f32 %v103, %v224
    %v266 = vadd.f32 %v104, %v227
    %v267 = vadd.f32 %v105, %v230
    %v268 = vadd.f32 %v106, %v233
    %v269 = vadd.f32 %v107, %v236
    %v270 = vadd.f32 %v108, %v239
    %v271 = vadd.f32 %v109, %v242
    %v272 = vadd.f32 %v110, %v245
    %v273 = vadd.f32 %v111, %v248
    %v274 = vadd.f32 %v112, %v251
    %v275 = vadd.f32 %v113, %v254
    %v276 = vadd.f32 %v114, %v257
    %v277 = vadd.f32 %v115, %v260
    %278 = vst [vmem:[#allocation2] sm:$0xff] %v262
    %279 = vst [vmem:[#allocation2 + $0x8] sm:$0xff] %v263
    %280 = vst [vmem:[#allocation2 + $0x10] sm:$0xff] %v264
    %281 = vst [vmem:[#allocation2 + $0x18] sm:$0xff] %v265
    %282 = vst [vmem:[#allocation2 + $0x20] sm:$0xff] %v266
    %283 = vst [vmem:[#allocation2 + $0x28] sm:$0xff] %v267
    %284 = vst [vmem:[#allocation2 + $0x30] sm:$0xff] %v268
    %285 = vst [vmem:[#allocation2 + $0x38] sm:$0xff] %v269
    %286 = vst [vmem:[#allocation2 + $0x40] sm:$0xff] %v270
    %287 = vst [vmem:[#allocation2 + $0x48] sm:$0xff] %v271
    %288 = vst [vmem:[#allocation2 + $0x50] sm:$0xff] %v272
    %289 = vst [vmem:[#allocation2 + $0x58] sm:$0xff] %v273
    %290 = vst [vmem:[#allocation2 + $0x60] sm:$0xff] %v274
    %291 = vst [vmem:[#allocation2 + $0x68] sm:$0xff] %v275
    %292 = vst [vmem:[#allocation2 + $0x70] sm:$0xff] %v276
    %293 = vst [vmem:[#allocation2 + $0x78] sm:$0xff] %v277
    %v294 = vpack.c.bf16 %v83, %v83
    %v295 = vpack.c.bf16 %v85, %v84
    %v296 = vpack.c.bf16 %v87, %v86
    %v297 = vpack.c.bf16 %v89, %v88
    %v298 = vpack.c.bf16 %v91, %v90
    %v299 = vpack.c.bf16 %v93, %v92
    %v300 = vpack.c.bf16 %v95, %v94
    %v301 = vpack.c.bf16 %v97, %v96
    %v302 = vpack.c.bf16 %v99, %v98
    %303 = vmatpush.bf16.xpose.msra.mxu0 %v302
    %304 = vmatpush.bf16.xpose.msra.mxu0 %v301
    %305 = vmatpush.bf16.xpose.msra.mxu0 %v300
    %306 = vmatpush.bf16.xpose.msra.mxu0 %v299
    %307 = vmatpush.bf16.xpose.msra.mxu0 %v298
    %308 = vmatpush.bf16.xpose.msra.mxu0 %v297
    %309 = vmatpush.bf16.xpose.msra.mxu0 %v296
    %310 = vmatpush.bf16.xpose.msra.mxu0 %v295
    %311 = vmatmul.bf16.gmra.mxu0 %v294
    %v312 = vpop.f32.mrf.mxu0
    %v313 = vadd.f32 0.0, %v312
    %v314 = vpop.f32.mrf.mxu0
    %315 = vdwg.mxu0
    %v316 = vtanh.pop %v313
    %317 = vst [vmem:[#allocation9] sm:$0xff] %v316
    %v318 = vpack.c.bf16 %v316, %v316
    %v319 = vld [vmem:[#allocation3] sm:$0xff]
    %v320 = vld [vmem:[#allocation3 + $0x8] sm:$0xff]
    %v321 = vld [vmem:[#allocation3 + $0x10] sm:$0xff]
    %v322 = vld [vmem:[#allocation3 + $0x18] sm:$0xff]
    %v323 = vld [vmem:[#allocation3 + $0x20] sm:$0xff]
    %v324 = vld [vmem:[#allocation3 + $0x28] sm:$0xff]
    %v325 = vld [vmem:[#allocation3 + $0x30] sm:$0xff]
    %v326 = vld [vmem:[#allocation3 + $0x38] sm:$0xff]
    %v327 = vld [vmem:[#allocation3 + $0x40] sm:$0xff]
    %v328 = vld [vmem:[#allocation3 + $0x48] sm:$0xff]
    %v329 = vld [vmem:[#allocation3 + $0x50] sm:$0xff]
    %v330 = vld [vmem:[#allocation3 + $0x58] sm:$0xff]
    %v331 = vld [vmem:[#allocation3 + $0x60] sm:$0xff]
    %v332 = vld [vmem:[#allocation3 + $0x68] sm:$0xff]
    %v333 = vld [vmem:[#allocation3 + $0x70] sm:$0xff]
    %v334 = vld [vmem:[#allocation3 + $0x78] sm:$0xff]
    %335 = vxpose.xlu0.c.b16.start [1/8] %v318, 128
    %336 = vxpose.xlu0.c.b16.cont [2/8] 0, 128
    %337 = vxpose.xlu0.c.b16.cont [3/8] 0, 128
    %338 = vxpose.xlu0.c.b16.cont [4/8] 0, 128
    %339 = vxpose.xlu0.c.b16.cont [5/8] 0, 128
    %340 = vxpose.xlu0.c.b16.cont [6/8] 0, 128
    %341 = vxpose.xlu0.c.b16.cont [7/8] 0, 128
    %342 = vxpose.xlu0.c.b16.end [8/8] 0, 128
    %v343 = vpop.trf.xlu0
    %v344 = vpop.trf.xlu0
    %v345 = vpop.trf.xlu0
    %v346 = vpop.trf.xlu0
    %v347 = vpop.trf.xlu0
    %v348 = vpop.trf.xlu0
    %v349 = vpop.trf.xlu0
    %v350 = vpop.trf.xlu0
    %v352 = vsel %vm148, %v343, 0
    %v355 = vsel %vm148, %v344, 0
    %v358 = vsel %vm148, %v345, 0
    %v361 = vsel %vm148, %v346, 0
    %v364 = vsel %vm148, %v347, 0
    %v367 = vsel %vm148, %v348, 0
    %v370 = vsel %vm148, %v349, 0
    %v373 = vsel %vm148, %v350, 0
    %vm375 = vcmask 1043456
    %v377 = vsel %vm375, %v318, 0
    %379 = vmatpush.bf16.msra.mxu0 0
    %380 = vmatpush.bf16.msra.mxu0 0
    %381 = vmatpush.bf16.msra.mxu0 0
    %382 = vmatpush.bf16.msra.mxu0 0
    %383 = vmatpush.bf16.msra.mxu0 0
    %384 = vmatpush.bf16.msra.mxu0 0
    %385 = vmatpush.bf16.msra.mxu0 0
    %386 = vmatpush.bf16.msra.mxu0 %v377
    %387 = vmatmul.bf16.gmra.mxu0 %v352
    %v388 = vpop.f32.mrf.mxu0
    %v389 = vadd.f32 0.0, %v388
    %v390 = vpop.f32.mrf.mxu0
    %v391 = vadd.f32 0.0, %v390
    %392 = vmatmul.bf16.gmra.mxu0 %v355
    %v393 = vpop.f32.mrf.mxu0
    %v394 = vadd.f32 0.0, %v393
    %v395 = vpop.f32.mrf.mxu0
    %v396 = vadd.f32 0.0, %v395
    %397 = vmatmul.bf16.gmra.mxu0 %v358
    %v398 = vpop.f32.mrf.mxu0
    %v399 = vadd.f32 0.0, %v398
    %v400 = vpop.f32.mrf.mxu0
    %v401 = vadd.f32 0.0, %v400
    %402 = vmatmul.bf16.gmra.mxu0 %v361
    %v403 = vpop.f32.mrf.mxu0
    %v404 = vadd.f32 0.0, %v403
    %v405 = vpop.f32.mrf.mxu0
    %v406 = vadd.f32 0.0, %v405
    %407 = vmatmul.bf16.gmra.mxu0 %v364
    %v408 = vpop.f32.mrf.mxu0
    %v409 = vadd.f32 0.0, %v408
    %v410 = vpop.f32.mrf.mxu0
    %v411 = vadd.f32 0.0, %v410
    %412 = vmatmul.bf16.gmra.mxu0 %v367
    %v413 = vpop.f32.mrf.mxu0
    %v414 = vadd.f32 0.0, %v413
    %v415 = vpop.f32.mrf.mxu0
    %v416 = vadd.f32 0.0, %v415
    %417 = vmatmul.bf16.gmra.mxu0 %v370
    %v418 = vpop.f32.mrf.mxu0
    %v419 = vadd.f32 0.0, %v418
    %v420 = vpop.f32.mrf.mxu0
    %v421 = vadd.f32 0.0, %v420
    %422 = vmatmul.bf16.gmra.mxu0 %v373
    %v423 = vpop.f32.mrf.mxu0
    %v424 = vadd.f32 0.0, %v423
    %v425 = vpop.f32.mrf.mxu0
    %v426 = vadd.f32 0.0, %v425
    %427 = vdwg.mxu0
    %v428 = vadd.f32 %v319, %v389
    %v429 = vadd.f32 %v320, %v391
    %v430 = vadd.f32 %v321, %v394
    %v431 = vadd.f32 %v322, %v396
    %v432 = vadd.f32 %v323, %v399
    %v433 = vadd.f32 %v324, %v401
    %v434 = vadd.f32 %v325, %v404
    %v435 = vadd.f32 %v326, %v406
    %v436 = vadd.f32 %v327, %v409
    %v437 = vadd.f32 %v328, %v411
    %v438 = vadd.f32 %v329, %v414
    %v439 = vadd.f32 %v330, %v416
    %v440 = vadd.f32 %v331, %v419
    %v441 = vadd.f32 %v332, %v421
    %v442 = vadd.f32 %v333, %v424
    %v443 = vadd.f32 %v334, %v426
    %444 = vst [vmem:[#allocation3] sm:$0xff] %v428
    %445 = vst [vmem:[#allocation3 + $0x8] sm:$0xff] %v429
    %446 = vst [vmem:[#allocation3 + $0x10] sm:$0xff] %v430
    %447 = vst [vmem:[#allocation3 + $0x18] sm:$0xff] %v431
    %448 = vst [vmem:[#allocation3 + $0x20] sm:$0xff] %v432
    %449 = vst [vmem:[#allocation3 + $0x28] sm:$0xff] %v433
    %450 = vst [vmem:[#allocation3 + $0x30] sm:$0xff] %v434
    %451 = vst [vmem:[#allocation3 + $0x38] sm:$0xff] %v435
    %452 = vst [vmem:[#allocation3 + $0x40] sm:$0xff] %v436
    %453 = vst [vmem:[#allocation3 + $0x48] sm:$0xff] %v437
    %454 = vst [vmem:[#allocation3 + $0x50] sm:$0xff] %v438
    %455 = vst [vmem:[#allocation3 + $0x58] sm:$0xff] %v439
    %456 = vst [vmem:[#allocation3 + $0x60] sm:$0xff] %v440
    %457 = vst [vmem:[#allocation3 + $0x68] sm:$0xff] %v441
    %458 = vst [vmem:[#allocation3 + $0x70] sm:$0xff] %v442
    %459 = vst [vmem:[#allocation3 + $0x78] sm:$0xff] %v443
    // Predicated region
    $region22: #{tpu_custom_call.1} parent=1 // pred_check
      %p460 = pneg %p47
    $region23: #{tpu_custom_call.1} parent=1 // pred_check_branch
      %462 = sbr.rel (%p460) target = $region25
    $region24: #{tpu_custom_call.1} parent=1 // pred_region
      %v463 = vld [vmem:[#allocation2] sm:$0xff]
      %v464 = vld [vmem:[#allocation2 + $0x8] sm:$0xff]
      %v465 = vld [vmem:[#allocation2 + $0x10] sm:$0xff]
      %v466 = vld [vmem:[#allocation2 + $0x18] sm:$0xff]
      %v467 = vld [vmem:[#allocation2 + $0x20] sm:$0xff]
      %v468 = vld [vmem:[#allocation2 + $0x28] sm:$0xff]
      %v469 = vld [vmem:[#allocation2 + $0x30] sm:$0xff]
      %v470 = vld [vmem:[#allocation2 + $0x38] sm:$0xff]
      %v471 = vld [vmem:[#allocation2 + $0x40] sm:$0xff]
      %v472 = vld [vmem:[#allocation2 + $0x48] sm:$0xff]
      %v473 = vld [vmem:[#allocation2 + $0x50] sm:$0xff]
      %v474 = vld [vmem:[#allocation2 + $0x58] sm:$0xff]
      %v475 = vld [vmem:[#allocation2 + $0x60] sm:$0xff]
      %v476 = vld [vmem:[#allocation2 + $0x68] sm:$0xff]
      %v477 = vld [vmem:[#allocation2 + $0x70] sm:$0xff]
      %v478 = vld [vmem:[#allocation2 + $0x78] sm:$0xff]
      %v479 = vmul.f32 %v463, 0.125
      %v480 = vmul.f32 %v464, 0.125
      %v481 = vmul.f32 %v465, 0.125
      %v482 = vmul.f32 %v466, 0.125
      %v483 = vmul.f32 %v467, 0.125
      %v484 = vmul.f32 %v468, 0.125
      %v485 = vmul.f32 %v469, 0.125
      %v486 = vmul.f32 %v470, 0.125
      %v487 = vmul.f32 %v471, 0.125
      %v488 = vmul.f32 %v472, 0.125
      %v489 = vmul.f32 %v473, 0.125
      %v490 = vmul.f32 %v474, 0.125
      %v491 = vmul.f32 %v475, 0.125
      %v492 = vmul.f32 %v476, 0.125
      %v493 = vmul.f32 %v477, 0.125
      %v494 = vmul.f32 %v478, 0.125
      %495 = vst [vmem:[#allocation10] sm:$0xff] %v479
      %496 = vst [vmem:[#allocation10 + $0x8] sm:$0xff] %v480
      %497 = vst [vmem:[#allocation10 + $0x10] sm:$0xff] %v481
      %498 = vst [vmem:[#allocation10 + $0x18] sm:$0xff] %v482
      %499 = vst [vmem:[#allocation10 + $0x20] sm:$0xff] %v483
      %500 = vst [vmem:[#allocation10 + $0x28] sm:$0xff] %v484
      %501 = vst [vmem:[#allocation10 + $0x30] sm:$0xff] %v485
      %502 = vst [vmem:[#allocation10 + $0x38] sm:$0xff] %v486
      %503 = vst [vmem:[#allocation10 + $0x40] sm:$0xff] %v487
      %504 = vst [vmem:[#allocation10 + $0x48] sm:$0xff] %v488
      %505 = vst [vmem:[#allocation10 + $0x50] sm:$0xff] %v489
      %506 = vst [vmem:[#allocation10 + $0x58] sm:$0xff] %v490
      %507 = vst [vmem:[#allocation10 + $0x60] sm:$0xff] %v491
      %508 = vst [vmem:[#allocation10 + $0x68] sm:$0xff] %v492
      %509 = vst [vmem:[#allocation10 + $0x70] sm:$0xff] %v493
      %510 = vst [vmem:[#allocation10 + $0x78] sm:$0xff] %v494
      %v511 = vld [vmem:[#allocation3] sm:$0xff]
      %v512 = vld [vmem:[#allocation3 + $0x8] sm:$0xff]
      %v513 = vld [vmem:[#allocation3 + $0x10] sm:$0xff]
      %v514 = vld [vmem:[#allocation3 + $0x18] sm:$0xff]
      %v515 = vld [vmem:[#allocation3 + $0x20] sm:$0xff]
      %v516 = vld [vmem:[#allocation3 + $0x28] sm:$0xff]
      %v517 = vld [vmem:[#allocation3 + $0x30] sm:$0xff]
      %v518 = vld [vmem:[#allocation3 + $0x38] sm:$0xff]
      %v519 = vld [vmem:[#allocation3 + $0x40] sm:$0xff]
      %v520 = vld [vmem:[#allocation3 + $0x48] sm:$0xff]
      %v521 = vld [vmem:[#allocation3 + $0x50] sm:$0xff]
      %v522 = vld [vmem:[#allocation3 + $0x58] sm:$0xff]
      %v523 = vld [vmem:[#allocation3 + $0x60] sm:$0xff]
      %v524 = vld [vmem:[#allocation3 + $0x68] sm:$0xff]
      %v525 = vld [vmem:[#allocation3 + $0x70] sm:$0xff]
      %v526 = vld [vmem:[#allocation3 + $0x78] sm:$0xff]
      %v527 = vmul.f32 %v511, 0.125
      %v528 = vmul.f32 %v512, 0.125
      %v529 = vmul.f32 %v513, 0.125
      %v530 = vmul.f32 %v514, 0.125
      %v531 = vmul.f32 %v515, 0.125
      %v532 = vmul.f32 %v516, 0.125
      %v533 = vmul.f32 %v517, 0.125
      %v534 = vmul.f32 %v518, 0.125
      %v535 = vmul.f32 %v519, 0.125
      %v536 = vmul.f32 %v520, 0.125
      %v537 = vmul.f32 %v521, 0.125
      %v538 = vmul.f32 %v522, 0.125
      %v539 = vmul.f32 %v523, 0.125
      %v540 = vmul.f32 %v524, 0.125
      %v541 = vmul.f32 %v525, 0.125
      %v542 = vmul.f32 %v526, 0.125
      %543 = vst [vmem:[#allocation12] sm:$0xff] %v527
      %544 = vst [vmem:[#allocation12 + $0x8] sm:$0xff] %v528
      %545 = vst [vmem:[#allocation12 + $0x10] sm:$0xff] %v529
      %546 = vst [vmem:[#allocation12 + $0x18] sm:$0xff] %v530
      %547 = vst [vmem:[#allocation12 + $0x20] sm:$0xff] %v531
      %548 = vst [vmem:[#allocation12 + $0x28] sm:$0xff] %v532
      %549 = vst [vmem:[#allocation12 + $0x30] sm:$0xff] %v533
      %550 = vst [vmem:[#allocation12 + $0x38] sm:$0xff] %v534
      %551 = vst [vmem:[#allocation12 + $0x40] sm:$0xff] %v535
      %552 = vst [vmem:[#allocation12 + $0x48] sm:$0xff] %v536
      %553 = vst [vmem:[#allocation12 + $0x50] sm:$0xff] %v537
      %554 = vst [vmem:[#allocation12 + $0x58] sm:$0xff] %v538
      %555 = vst [vmem:[#allocation12 + $0x60] sm:$0xff] %v539
      %556 = vst [vmem:[#allocation12 + $0x68] sm:$0xff] %v540
      %557 = vst [vmem:[#allocation12 + $0x70] sm:$0xff] %v541
      %558 = vst [vmem:[#allocation12 + $0x78] sm:$0xff] %v542
    $region25: #{tpu_custom_call.1} parent=1 // pred_fallthru
      _
    // Predicated region
    $region26: #{tpu_custom_call.1} parent=1 // pred_check
      _
    $region27: #{tpu_custom_call.1} parent=1 // pred_check_branch
      %560 = sbr.rel (0) target = $region29
    $region28: #{tpu_custom_call.1} parent=1 // pred_region
      %562 = vsyncadd [#allocation6], 0
      %s564 = sshll.u32 [#allocation9], 4
      %s565 = int_to_ptr.vmem [resolvable:$true] %s564
      %s566 = sshll.u32 %s2, 4
      %s567 = int_to_ptr.hbm [resolvable:$true] %s566
      %569 = dma.vmem_to_hbm [thread:$0]  %s565, 128, %s567, [#allocation6]
    $region29: #{tpu_custom_call.1} parent=1 // pred_fallthru
      _
    // Predicated region
    $region30: #{tpu_custom_call.1} parent=1 // pred_check
      _
    $region31: #{tpu_custom_call.1} parent=1 // pred_check_branch
      %571 = sbr.rel (0) target = $region33
    $region32: #{tpu_custom_call.1} parent=1 // pred_region
      %573 = vsyncadd [#allocation11], 0
      %s574 = sshll.u32 [#allocation10], 4
      %s575 = int_to_ptr.vmem [resolvable:$true] %s574
      %s576 = sshll.u32 %s3, 4
      %s577 = int_to_ptr.hbm [resolvable:$true] %s576
      %582 = dma.vmem_to_hbm [thread:$0]  %s575, 2048, %s577, [#allocation11], 128, 128, 8
    $region33: #{tpu_custom_call.1} parent=1 // pred_fallthru
      _
    // Predicated region
    $region34: #{tpu_custom_call.1} parent=1 // pred_check
      _
    $region35: #{tpu_custom_call.1} parent=1 // pred_check_branch
      %584 = sbr.rel (0) target = $region37
    $region36: #{tpu_custom_call.1} parent=1 // pred_region
      %586 = vsyncadd [#allocation11], 0
      %s587 = sshll.u32 [#allocation12], 4
      %s588 = int_to_ptr.vmem [resolvable:$true] %s587
      %s589 = sshll.u32 %s4, 4
      %s590 = int_to_ptr.hbm [resolvable:$true] %s589
      %595 = dma.vmem_to_hbm [thread:$0]  %s588, 2048, %s590, [#allocation11], 128, 128, 8
    $region37: #{tpu_custom_call.1} parent=1 // pred_fallthru
      _
    // Predicated region
    $region38: #{tpu_custom_call.1} parent=1 // pred_check
      _
    $region39: #{tpu_custom_call.1} parent=1 // pred_check_branch
      %597 = sbr.rel (0) target = $region41
    $region40: #{tpu_custom_call.1} parent=1 // pred_region
      %599 = dma.done [#allocation6], 128
    $region41: #{tpu_custom_call.1} parent=1 // pred_fallthru
      _
    // Predicated region
    $region42: #{tpu_custom_call.1} parent=1 // pred_check
      _
    $region43: #{tpu_custom_call.1} parent=1 // pred_check_branch
      %601 = sbr.rel (0) target = $region45
    $region44: #{tpu_custom_call.1} parent=1 // pred_region
      %603 = dma.done [#allocation11], 2048
    $region45: #{tpu_custom_call.1} parent=1 // pred_fallthru
      _
    // Predicated region
    $region46: #{tpu_custom_call.1} parent=1 // pred_check
      _
    $region47: #{tpu_custom_call.1} parent=1 // pred_check_branch
      %605 = sbr.rel (0) target = $region49
    $region48: #{tpu_custom_call.1} parent=1 // pred_region
      %607 = dma.done [#allocation11], 2048
    $region49: #{tpu_custom_call.1} parent=1 // pred_fallthru
      _
    %608 = vsyncpa [#allocation5], 1
    %609 = vsyncpa [#allocation8], 1
    %610 = vsyncpa [#allocation6], 1
    %611 = vsyncpa [#allocation11], 1

</llo_original>
